<compile_context>
chip_gen: v7x
topology: tpu7x:2x2x1
jax: 0.10.0
libtpu: 0.0.40
codegen_flags: <defaults>
</compile_context>

<pallas_src>
import jax
import jax.numpy as jnp
from jax import lax
from jax.experimental import pallas as pl
from jax.experimental.pallas import tpu as pltpu


def _round_up(x, m):
    return ((x + m - 1) // m) * m


def forward_model_kernel(s_ref, a_ref, ws_ref, wa_ref, b_ref, o_ref):
    # cat([s, a], -1) @ W.T + b  ==  s @ Ws + a @ Wa + b   (no lane concat).
    acc = jnp.dot(s_ref[...], ws_ref[...], preferred_element_type=jnp.float32)
    acc = acc + jnp.dot(a_ref[...], wa_ref[...], preferred_element_type=jnp.float32)
    acc = acc + b_ref[...]                     # (1, O) broadcast over batch tile
    # TODO(synk): if a last_activation callable is configured on the module,
    # apply its jnp equivalent here; default config is None (identity).
    o_ref[...] = acc.astype(o_ref.dtype)


def prepare_forward_model_params(weight, bias):
    """One-time layout prep (hoisted out of the per-call path).

    weight: PyTorch nn.Linear layout (O, 2E); bias: (O,).
    Returns (Ws (E, O), Wa (E, O), bias (1, O)) — no output-axis padding.
    """
    O, two_e = weight.shape
    E = two_e // 2
    ws = jnp.asarray(weight[:, :E].T, jnp.float32)
    wa = jnp.asarray(weight[:, E:].T, jnp.float32)
    b2 = jnp.asarray(bias, jnp.float32).reshape(1, O)
    return ws, wa, b2


def _forward_model_pallas(state_embedding, action_embedding, ws, wa, b2):
    """state/action: (B, E) f32; ws/wa: (E, O); b2: (1, O)."""
    B, E = state_embedding.shape
    O = ws.shape[1]

    # Batch tiling.  Output stays un-padded on the lane axis (block last dim
    # equals the full O, which is legal); only the batch may be padded, and
    # only for a ragged large B.
    if B <= 1024:
        TILE_B, num_tiles, B_pad = B, 1, B          # single full-dim tile, no pad
    else:
        # Even grid so v7x's two TensorCores both get work; TILE_B <= ~2048.
        num_tiles = max(2, 2 * pl.cdiv(_round_up(B, 8), 4096))
        TILE_B = _round_up(pl.cdiv(B, num_tiles), 8)
        B_pad = TILE_B * num_tiles

    if B_pad != B:
        # Only hit for ragged large batches (never in the demo); pads a few
        # rows.  TODO(synk): replace with a masked tail tile to avoid the copy.
        pad = ((0, B_pad - B), (0, 0))
        state_embedding = jnp.pad(state_embedding, pad)
        action_embedding = jnp.pad(action_embedding, pad)

    out = pl.pallas_call(
        forward_model_kernel,
        out_shape=jax.ShapeDtypeStruct((B_pad, O), jnp.float32),
        grid=(num_tiles,),
        in_specs=[
            pl.BlockSpec((TILE_B, E), lambda i: (i, 0)),   # state tile
            pl.BlockSpec((TILE_B, E), lambda i: (i, 0)),   # action tile
            pl.BlockSpec((E, O), lambda i: (0, 0)),        # Ws (VMEM-resident)
            pl.BlockSpec((E, O), lambda i: (0, 0)),        # Wa (VMEM-resident)
            pl.BlockSpec((1, O), lambda i: (0, 0)),        # bias (VMEM-resident)
        ],
        out_specs=pl.BlockSpec((TILE_B, O), lambda i: (i, 0)),
        compiler_params=pltpu.CompilerParams(
            dimension_semantics=("parallel",)),
    )(state_embedding, action_embedding, ws, wa, b2)

    return out if B_pad == B else out[:B]


def forward_model(state_embedding, action_embedding, params,
                  last_activation=None, *, batch_threshold=8192,
                  force_pallas=False):
    """ForwardModel.forward. `params` = prepare_forward_model_params(W, b)."""
    ws, wa, b2 = params
    B = state_embedding.shape[0]
    if force_pallas or B >= batch_threshold:
        reward = _forward_model_pallas(state_embedding, action_embedding,
                                       ws, wa, b2)
    else:
        # Tiny problem: pallas_call fixed overhead dominates -> fused XLA path,
        # highest precision for parity with the kernel's f32 accumulation.
        reward = (jnp.dot(state_embedding, ws, precision=lax.Precision.HIGHEST)
                  + jnp.dot(action_embedding, wa, precision=lax.Precision.HIGHEST)
                  + b2)
    if last_activation is not None:
        reward = last_activation(reward)
    return reward


if __name__ == "__main__":
    # Small shapes consistent with the module: encode_dim=32, output_dim=8, batch=8.
    B, E, O = 8, 32, 8

    key = jax.random.PRNGKey(0)
    k_s, k_a, k_w, k_b = jax.random.split(key, 4)

    state_embedding = jax.random.normal(k_s, (B, E), dtype=jnp.float32)
    action_embedding = jax.random.normal(k_a, (B, E), dtype=jnp.float32)

    # nn.Linear-style init: uniform(-1/sqrt(fan_in), 1/sqrt(fan_in)).
    fan_in = 2 * E
    bound = 1.0 / float(fan_in) ** 0.5
    weight = jax.random.uniform(k_w, (O, 2 * E), jnp.float32, -bound, bound)
    bias = jax.random.uniform(k_b, (O,), jnp.float32, -bound, bound)

    # Hoisted one-time weight layout prep (reused across all calls below).
    params = prepare_forward_model_params(weight, bias)

    # Small-shape run: force the Pallas path so the kernel itself executes.
    out = forward_model(state_embedding, action_embedding, params,
                        force_pallas=True)
    out = jax.block_until_ready(out)
    ref = jnp.concatenate([state_embedding, action_embedding], axis=-1) @ weight.T + bias
    assert out.shape == (B, O)
    assert jnp.allclose(out, ref, atol=1e-5, rtol=1e-5)

    # Larger batch: exercises the tiled, batch-parallel (even-grid) path.
    B2 = 2048
    k_s2, k_a2 = jax.random.split(jax.random.PRNGKey(1))
    s2 = jax.random.normal(k_s2, (B2, E), dtype=jnp.float32)
    a2 = jax.random.normal(k_a2, (B2, E), dtype=jnp.float32)
    out2 = jax.block_until_ready(
        forward_model(s2, a2, params, force_pallas=True))
    ref2 = jnp.concatenate([s2, a2], axis=-1) @ weight.T + bias
    assert out2.shape == (B2, O)
    assert jnp.allclose(out2, ref2, atol=1e-5, rtol=1e-5)

    print("KERNEL_OK")
</pallas_src>

<mosaic_0001>
module attributes {stable_mosaic.version = 11 : i64} {
  func.func @forward_model_kernel(%arg0: i32, %arg1: memref<8x32xf32, #tpu.memory_space<vmem>>, %arg2: memref<8x32xf32, #tpu.memory_space<vmem>>, %arg3: memref<32x8xf32, #tpu.memory_space<vmem>>, %arg4: memref<32x8xf32, #tpu.memory_space<vmem>>, %arg5: memref<1x8xf32, #tpu.memory_space<vmem>>, %arg6: memref<8x8xf32, #tpu.memory_space<vmem>>) attributes {dimension_semantics = [#tpu.dimension_semantics<parallel>], iteration_bounds = array<i64: 1>, scalar_prefetch = 0 : i64, scratch_operands = 0 : i64, tpu.core_type = #tpu.core_type<tc>, window_params = [{transform_indices = @transform_0, window_bounds = array<i64: 8, 32>}, {transform_indices = @transform_1, window_bounds = array<i64: 8, 32>}, {pipeline_mode = #tpu.pipeline_mode<synchronous>, transform_indices = @transform_2, window_bounds = array<i64: 32, 8>}, {pipeline_mode = #tpu.pipeline_mode<synchronous>, transform_indices = @transform_3, window_bounds = array<i64: 32, 8>}, {pipeline_mode = #tpu.pipeline_mode<synchronous>, transform_indices = @transform_4, window_bounds = array<i64: 1, 8>}, {transform_indices = @transform_5, window_bounds = array<i64: 8, 8>}]} {
    %c0 = arith.constant 0 : index
    %c0_0 = arith.constant 0 : index
    %0 = vector.load %arg1[%c0, %c0_0] : memref<8x32xf32, #tpu.memory_space<vmem>>, vector<8x32xf32>
    %c0_1 = arith.constant 0 : index
    %c0_2 = arith.constant 0 : index
    %1 = vector.load %arg3[%c0_1, %c0_2] : memref<32x8xf32, #tpu.memory_space<vmem>>, vector<32x8xf32>
    %cst = arith.constant dense<0.000000e+00> : vector<8x8xf32>
    %2 = tpu.matmul %0, %1, %cst {dimension_numbers = #tpu.dot_dimension_numbers<[1], [0], [0], [1], [0, 0, 1, 1], [], []>} : vector<8x32xf32>, vector<32x8xf32>, vector<8x8xf32> -> vector<8x8xf32>
    %c0_3 = arith.constant 0 : index
    %c0_4 = arith.constant 0 : index
    %3 = vector.load %arg2[%c0_3, %c0_4] : memref<8x32xf32, #tpu.memory_space<vmem>>, vector<8x32xf32>
    %c0_5 = arith.constant 0 : index
    %c0_6 = arith.constant 0 : index
    %4 = vector.load %arg4[%c0_5, %c0_6] : memref<32x8xf32, #tpu.memory_space<vmem>>, vector<32x8xf32>
    %cst_7 = arith.constant dense<0.000000e+00> : vector<8x8xf32>
    %5 = tpu.matmul %3, %4, %cst_7 {dimension_numbers = #tpu.dot_dimension_numbers<[1], [0], [0], [1], [0, 0, 1, 1], [], []>} : vector<8x32xf32>, vector<32x8xf32>, vector<8x8xf32> -> vector<8x8xf32>
    %6 = arith.addf %2, %5 : vector<8x8xf32>
    %c0_8 = arith.constant 0 : index
    %c0_9 = arith.constant 0 : index
    %7 = vector.load %arg5[%c0_8, %c0_9] : memref<1x8xf32, #tpu.memory_space<vmem>>, vector<1x8xf32>
    %8 = vector.broadcast %7 : vector<1x8xf32> to vector<8x8xf32>
    %9 = arith.addf %6, %8 : vector<8x8xf32>
    %c0_10 = arith.constant 0 : index
    %c0_11 = arith.constant 0 : index
    %10 = vector.load %arg6[%c0_10, %c0_11] : memref<8x8xf32, #tpu.memory_space<vmem>>, vector<8x8xf32>
    tpu.vector_store %arg6[%c0_10, %c0_11], %9 {strides = array<i32>} : memref<8x8xf32, #tpu.memory_space<vmem>>, vector<8x8xf32>,
    return
  }
  func.func @transform_0(%arg0: i32) -> (i32, i32) {
    %c0_i32 = arith.constant 0 : i32
    %c0_i32_0 = arith.constant 0 : i32
    return %arg0, %c0_i32 : i32, i32
  }
  func.func @transform_1(%arg0: i32) -> (i32, i32) {
    %c0_i32 = arith.constant 0 : i32
    %c0_i32_0 = arith.constant 0 : i32
    return %arg0, %c0_i32 : i32, i32
  }
  func.func @transform_2(%arg0: i32) -> (i32, i32) {
    %c0_i32 = arith.constant 0 : i32
    %c0_i32_0 = arith.constant 0 : i32
    %c0_i32_1 = arith.constant 0 : i32
    return %c0_i32, %c0_i32_0 : i32, i32
  }
  func.func @transform_3(%arg0: i32) -> (i32, i32) {
    %c0_i32 = arith.constant 0 : i32
    %c0_i32_0 = arith.constant 0 : i32
    %c0_i32_1 = arith.constant 0 : i32
    return %c0_i32, %c0_i32_0 : i32, i32
  }
  func.func @transform_4(%arg0: i32) -> (i32, i32) {
    %c0_i32 = arith.constant 0 : i32
    %c0_i32_0 = arith.constant 0 : i32
    %c0_i32_1 = arith.constant 0 : i32
    return %c0_i32, %c0_i32_0 : i32, i32
  }
  func.func @transform_5(%arg0: i32) -> (i32, i32) {
    %c0_i32 = arith.constant 0 : i32
    %c0_i32_0 = arith.constant 0 : i32
    return %arg0, %c0_i32 : i32, i32
  }
}

</mosaic_0001>

<llo_original>
// kernel: tpu_custom_call.1
$region0: #{tpu_custom_call.1}
  #allocation0 [shape = 'u32[]', space=smem, size = 0x4, offset = 0x4, fixed_abs, tag = 'smem constant byte address 0x4 - core index']
  #allocation1 [shape = 'u32[144,128]{1,0:T(1,128)}', space=vmem, size = 0x12000, scoped, tag = 'internal scratch']
  %s0 = inlined_call_operand.vmem [shape: f32[8,32], index: 0, kind: input, shape index: {}]
  %s1 = inlined_call_operand.vmem [shape: f32[8,32], index: 1, kind: input, shape index: {}]
  %s2 = inlined_call_operand.vmem [shape: f32[32,8], index: 2, kind: input, shape index: {}]
  %s3 = inlined_call_operand.vmem [shape: f32[32,8], index: 3, kind: input, shape index: {}]
  %s4 = inlined_call_operand.vmem [shape: f32[1,8], index: 4, kind: input, shape index: {}]
  %s5 = inlined_call_operand.hbm [shape: f32[8,8], index: 5, kind: output, shape index: {}]
  %s6 = sld [smem:[#allocation0]]
  $region30: #{tpu_custom_call.1} parent=0
    _
  %s8 = ssub.s32 1, %s6
  %s9 = scalar_select 0, %s8, %s6
  $region1: #{tpu_custom_call.1} parent=0
    #allocation2 [shape = 'u8[4096]{0}', space=vmem, size = 0x1000, scoped, tag = 'output window, operand 0, single buffered']
    #allocation3 [shape = 's32[1]{0}', space=sflag, size = 0x4, scoped, tag = 'scoped memory for tpu_custom_call.1']
    %10 = vsyncpa [#allocation3], 0
    // Predicated region
    $region2: #{tpu_custom_call.1} parent=1 // pred_check
      _
    $region3: #{tpu_custom_call.1} parent=1 // pred_check_branch
      %12 = sbr.rel (0) target = $region5
    $region4: #{tpu_custom_call.1} parent=1 // pred_region
      _
    $region5: #{tpu_custom_call.1} parent=1 // pred_fallthru
      _
    // Predicated region
    $region6: #{tpu_custom_call.1} parent=1 // pred_check
      _
    $region7: #{tpu_custom_call.1} parent=1 // pred_check_branch
      %14 = sbr.rel (0) target = $region9
    $region8: #{tpu_custom_call.1} parent=1 // pred_region
      _
    $region9: #{tpu_custom_call.1} parent=1 // pred_fallthru
      _
    // Predicated region
    $region10: #{tpu_custom_call.1} parent=1 // pred_check
      _
    $region11: #{tpu_custom_call.1} parent=1 // pred_check_branch
      %16 = sbr.rel (0) target = $region13
    $region12: #{tpu_custom_call.1} parent=1 // pred_region
      _
    $region13: #{tpu_custom_call.1} parent=1 // pred_fallthru
      _
    // Predicated region
    $region14: #{tpu_custom_call.1} parent=1 // pred_check
      _
    $region15: #{tpu_custom_call.1} parent=1 // pred_check_branch
      %18 = sbr.rel (0) target = $region17
    $region16: #{tpu_custom_call.1} parent=1 // pred_region
      _
    $region17: #{tpu_custom_call.1} parent=1 // pred_fallthru
      _
    // Predicated region
    $region18: #{tpu_custom_call.1} parent=1 // pred_check
      _
    $region19: #{tpu_custom_call.1} parent=1 // pred_check_branch
      %20 = sbr.rel (0) target = $region21
    $region20: #{tpu_custom_call.1} parent=1 // pred_region
      _
    $region21: #{tpu_custom_call.1} parent=1 // pred_fallthru
      _
    %v21 = vld [vmem:[%s0] sm:$0xff]
    %v22 = vld [vmem:[%s2] sm:$0xff]
    %v23 = vld [vmem:[%s2 + $0x8] sm:$0xff]
    %v24 = vld [vmem:[%s2 + $0x10] sm:$0xff]
    %v25 = vld [vmem:[%s2 + $0x18] sm:$0xff]
    %v26 = vld [vmem:[%s1] sm:$0xff]
    %v27 = vld [vmem:[%s3] sm:$0xff]
    %v28 = vld [vmem:[%s3 + $0x8] sm:$0xff]
    %v29 = vld [vmem:[%s3 + $0x10] sm:$0xff]
    %v30 = vld [vmem:[%s3 + $0x18] sm:$0xff]
    %vm31 = vcmask 261120
    %v33 = vsel %vm31, %v26, 0
    %35 = vmatprep.subr.mxu0 0.0
    %36 = vmatpush1.msra.mxu0 %v27
    %37 = vmatprep.subr.mxu0 0.0
    %38 = vmatpush1.msra.mxu0 %v28
    %39 = vmatprep.subr.mxu0 0.0
    %40 = vmatpush1.msra.mxu0 %v29
    %41 = vmatprep.subr.mxu0 0.0
    %42 = vmatpush1.msra.mxu0 %v30
    %43 = vmatprep.subr.mxu0 0.0
    %44 = vmatpush1.msra.mxu0 0.0
    %45 = vmatprep.subr.mxu0 0.0
    %46 = vmatpush1.msra.mxu0 0.0
    %47 = vmatprep.subr.mxu0 0.0
    %48 = vmatpush1.msra.mxu0 0.0
    %49 = vmatprep.subr.mxu0 0.0
    %50 = vmatpush1.msra.mxu0 0.0
    %51 = vmatprep.subr.mxu0 0.0
    %52 = vmatpush1.msra.mxu0 0.0
    %53 = vmatprep.subr.mxu0 0.0
    %54 = vmatpush1.msra.mxu0 0.0
    %55 = vmatprep.subr.mxu0 0.0
    %56 = vmatpush1.msra.mxu0 0.0
    %57 = vmatprep.subr.mxu0 0.0
    %58 = vmatpush1.msra.mxu0 0.0
    %59 = vmatprep.subr.mxu0 0.0
    %60 = vmatpush1.msra.mxu0 0.0
    %61 = vmatprep.subr.mxu0 0.0
    %62 = vmatpush1.msra.mxu0 0.0
    %63 = vmatprep.subr.mxu0 0.0
    %64 = vmatpush1.msra.mxu0 0.0
    %65 = vmatprep.subr.mxu0 0.0
    %66 = vmatpush1.msra.mxu0 0.0
    %67 = vmatprep.subr.mxu0 0.0
    %68 = vmatpush1.msra.mxu0 0.0
    %69 = vmatprep.subr.mxu0 0.0
    %70 = vmatpush1.msra.mxu0 0.0
    %71 = vmatprep.subr.mxu0 0.0
    %72 = vmatpush1.msra.mxu0 0.0
    %73 = vmatprep.subr.mxu0 0.0
    %74 = vmatpush1.msra.mxu0 0.0
    %75 = vmatprep.subr.mxu0 0.0
    %76 = vmatpush1.msra.mxu0 0.0
    %77 = vmatprep.subr.mxu0 0.0
    %78 = vmatpush1.msra.mxu0 0.0
    %79 = vmatprep.subr.mxu0 0.0
    %80 = vmatpush1.msra.mxu0 0.0
    %81 = vmatprep.subr.mxu0 0.0
    %82 = vmatpush1.msra.mxu0 0.0
    %83 = vmatprep.subr.mxu0 0.0
    %84 = vmatpush1.msra.mxu0 0.0
    %85 = vmatprep.subr.mxu0 0.0
    %86 = vmatpush1.msra.mxu0 0.0
    %87 = vmatprep.subr.mxu0 0.0
    %88 = vmatpush1.msra.mxu0 0.0
    %89 = vmatprep.subr.mxu0 0.0
    %90 = vmatpush1.msra.mxu0 0.0
    %91 = vmatprep.subr.mxu0 0.0
    %92 = vmatpush1.msra.mxu0 0.0
    %93 = vmatprep.subr.mxu0 0.0
    %94 = vmatpush1.msra.mxu0 0.0
    %95 = vmatprep.subr.mxu0 0.0
    %96 = vmatpush1.msra.mxu0 0.0
    %97 = vmatprep.subr.mxu0 0.0
    %98 = vmatpush1.msra.mxu0 0.0
    %99 = vmatprep.mubr.f32.mxu0 0.0
    %100 = vmatmul.mubr.f32.gmra.mrb[0].mxu0 %v33
    %v101 = vpop.f32.mrb[0].mxu0
    %v102 = vadd.f32 0.0, %v101
    %v103 = vpop.f32.mrb[0].mxu0
    %104 = vdwg.mxu0
    %v106 = vsel %vm31, %v21, 0
    %108 = vmatprep.subr.mxu0 0.0
    %109 = vmatpush1.msra.mxu0 %v22
    %110 = vmatprep.subr.mxu0 0.0
    %111 = vmatpush1.msra.mxu0 %v23
    %112 = vmatprep.subr.mxu0 0.0
    %113 = vmatpush1.msra.mxu0 %v24
    %114 = vmatprep.subr.mxu0 0.0
    %115 = vmatpush1.msra.mxu0 %v25
    %116 = vmatprep.subr.mxu0 0.0
    %117 = vmatpush1.msra.mxu0 0.0
    %118 = vmatprep.subr.mxu0 0.0
    %119 = vmatpush1.msra.mxu0 0.0
    %120 = vmatprep.subr.mxu0 0.0
    %121 = vmatpush1.msra.mxu0 0.0
    %122 = vmatprep.subr.mxu0 0.0
    %123 = vmatpush1.msra.mxu0 0.0
    %124 = vmatprep.subr.mxu0 0.0
    %125 = vmatpush1.msra.mxu0 0.0
    %126 = vmatprep.subr.mxu0 0.0
    %127 = vmatpush1.msra.mxu0 0.0
    %128 = vmatprep.subr.mxu0 0.0
    %129 = vmatpush1.msra.mxu0 0.0
    %130 = vmatprep.subr.mxu0 0.0
    %131 = vmatpush1.msra.mxu0 0.0
    %132 = vmatprep.subr.mxu0 0.0
    %133 = vmatpush1.msra.mxu0 0.0
    %134 = vmatprep.subr.mxu0 0.0
    %135 = vmatpush1.msra.mxu0 0.0
    %136 = vmatprep.subr.mxu0 0.0
    %137 = vmatpush1.msra.mxu0 0.0
    %138 = vmatprep.subr.mxu0 0.0
    %139 = vmatpush1.msra.mxu0 0.0
    %140 = vmatprep.subr.mxu0 0.0
    %141 = vmatpush1.msra.mxu0 0.0
    %142 = vmatprep.subr.mxu0 0.0
    %143 = vmatpush1.msra.mxu0 0.0
    %144 = vmatprep.subr.mxu0 0.0
    %145 = vmatpush1.msra.mxu0 0.0
    %146 = vmatprep.subr.mxu0 0.0
    %147 = vmatpush1.msra.mxu0 0.0
    %148 = vmatprep.subr.mxu0 0.0
    %149 = vmatpush1.msra.mxu0 0.0
    %150 = vmatprep.subr.mxu0 0.0
    %151 = vmatpush1.msra.mxu0 0.0
    %152 = vmatprep.subr.mxu0 0.0
    %153 = vmatpush1.msra.mxu0 0.0
    %154 = vmatprep.subr.mxu0 0.0
    %155 = vmatpush1.msra.mxu0 0.0
    %156 = vmatprep.subr.mxu0 0.0
    %157 = vmatpush1.msra.mxu0 0.0
    %158 = vmatprep.subr.mxu0 0.0
    %159 = vmatpush1.msra.mxu0 0.0
    %160 = vmatprep.subr.mxu0 0.0
    %161 = vmatpush1.msra.mxu0 0.0
    %162 = vmatprep.subr.mxu0 0.0
    %163 = vmatpush1.msra.mxu0 0.0
    %164 = vmatprep.subr.mxu0 0.0
    %165 = vmatpush1.msra.mxu0 0.0
    %166 = vmatprep.subr.mxu0 0.0
    %167 = vmatpush1.msra.mxu0 0.0
    %168 = vmatprep.subr.mxu0 0.0
    %169 = vmatpush1.msra.mxu0 0.0
    %170 = vmatprep.subr.mxu0 0.0
    %171 = vmatpush1.msra.mxu0 0.0
    %172 = vmatprep.mubr.f32.mxu0 0.0
    %173 = vmatmul.mubr.f32.gmra.mrb[0].mxu0 %v106
    %v174 = vpop.f32.mrb[0].mxu0
    %v175 = vadd.f32 %v102, %v174
    %v176 = vpop.f32.mrb[0].mxu0
    %177 = vdwg.mxu0
    %v178 = vld [vmem:[%s4] sm:$0x1]
    %v180 = vlaneseq
    %v181 = vshrl.u32 %v180, 7
    %v182 = vsub.s32 0, %v181
    %v183 = vrot.slane %v178, %v182
    %v185 = vadd.f32 %v175, %v183
    %vm186 = vcmask 64512
    %187 = vst.msk [vmem:[#allocation2] sm:$0xff] %vm186, %v185
    // Predicated region
    $region22: #{tpu_custom_call.1} parent=1 // pred_check
      _
    $region23: #{tpu_custom_call.1} parent=1 // pred_check_branch
      %189 = sbr.rel (0) target = $region25
    $region24: #{tpu_custom_call.1} parent=1 // pred_region
      %s191 = ssub.s32 128, 128
      %192 = vsyncadd [#allocation3], %s191
      %s194 = sshll.u32 [#allocation2], 4
      %s195 = int_to_ptr.vmem [resolvable:$true] %s194
      %197 = dma.vmem_to_hbm [thread:$0]  %s195, 128, %s5, [#allocation3]
    $region25: #{tpu_custom_call.1} parent=1 // pred_fallthru
      _
    // Predicated region
    $region26: #{tpu_custom_call.1} parent=1 // pred_check
      _
    $region27: #{tpu_custom_call.1} parent=1 // pred_check_branch
      %199 = sbr.rel (0) target = $region29
    $region28: #{tpu_custom_call.1} parent=1 // pred_region
      %200 = dma.done [#allocation3], 128
    $region29: #{tpu_custom_call.1} parent=1 // pred_fallthru
      _
    %201 = vsyncpa [#allocation3], 1

</llo_original>
